<compile_context>
chip_gen: v5e
topology: v5e:2x2
jax: 0.10.0
libtpu: 0.0.40
codegen_flags: <defaults>
</compile_context>

<pallas_src>
import jax
import jax.numpy as jnp
import numpy as np
from jax.experimental import pallas as pl
from jax.experimental.pallas import tpu as pltpu

EPS = 1e-7          # matches eps = torch.tensor(1e-07)
S = 7
C = 30
NUM_PARTIALS = 2    # leading "parallel" grid axis (v7x megacore); cheap elsewhere
MAX_TILE = 2048     # cells (lanes) per tile


def _round_up(x, m):
    return (x + m - 1) // m * m


def _yolo_loss_kernel(pre_ref, tgt_ref, out_ref, acc_ref):
    # TODO(synk): torch debug print() calls and autograd anomaly detection are
    # host-side side effects with no kernel equivalent; omitted.
    i = pl.program_id(1)

    @pl.when(i == 0)
    def _():
        acc_ref[...] = jnp.zeros_like(acc_ref)

    p = pre_ref[...]   # (30, TILE_N) f32, channel-major (cells on lanes)
    t = tgt_ref[...]   # (30, TILE_N) f32

    def rows(a, k):    # box k -> x, y, w, h, c as lane-dense (1, TILE_N) rows
        o = 5 * k
        return (a[o:o + 1, :], a[o + 1:o + 2, :], a[o + 2:o + 3, :],
                a[o + 3:o + 4, :], a[o + 4:o + 5, :])

    p0x, p0y, p0w, p0h, p0c = rows(p, 0)
    p1x, p1y, p1w, p1h, p1c = rows(p, 1)
    t0x, t0y, t0w, t0h, t0c = rows(t, 0)
    t1x, t1y, t1w, t1h, t1c = rows(t, 1)

    obj = (t0c > 0.0).astype(jnp.float32)     # target[..., 4] > 0
    noobj = (t0c == 0.0).astype(jnp.float32)  # target[..., 4] == 0
    # Zero-padded cells (wrapper padding) have obj == 0 and zero pre/target, so
    # they contribute exactly 0 to every masked term below.

    def pair_iou(px, py, pw, ph, tx, ty, tw, th):
        # bboxs_iou with x1y1x2y2=False, eps=1e-7 (elementwise per cell).
        b1x1, b1x2 = px - pw * 0.5, px + pw * 0.5
        b1y1, b1y2 = py - ph * 0.5, py + ph * 0.5
        b2x1, b2x2 = tx - tw * 0.5, tx + tw * 0.5
        b2y1, b2y2 = ty - th * 0.5, ty + th * 0.5
        iw = jnp.maximum(jnp.minimum(b1x2, b2x2) - jnp.maximum(b1x1, b2x1), 0.0)
        ih = jnp.maximum(jnp.minimum(b1y2, b2y2) - jnp.maximum(b1y1, b2y1), 0.0)
        inter = iw * ih + EPS
        # NOTE: +EPS on the heights only (h1/h2, not w1/w2) intentionally
        # mirrors the torch bboxs_iou source.
        w1, h1 = b1x2 - b1x1, b1y2 - b1y1 + EPS
        w2, h2 = b2x2 - b2x1, b2y2 - b2y1 + EPS
        union = w1 * h1 + w2 * h2 - inter + EPS
        return inter / union

    iou0 = pair_iou(p0x, p0y, p0w, p0h, t0x, t0y, t0w, t0h)
    iou1 = pair_iou(p1x, p1y, p1w, p1h, t1x, t1y, t1w, t1h)

    ind_is0 = iou0 >= iou1    # torch .max(0): first index on ties -> box 0
    ind0_is0 = iou0 <= iou1   # torch .min(0): first index on ties -> box 0
    tie = iou0 == iou1        # ties => responsible row == "min" row

    sel = jnp.where
    # responsible predicted box (index = argmax iou)
    prx, pry = sel(ind_is0, p0x, p1x), sel(ind_is0, p0y, p1y)
    prw, prh = sel(ind_is0, p0w, p1w), sel(ind_is0, p0h, p1h)
    prc = sel(ind_is0, p0c, p1c)
    # responsible target box (w, h, conf kept from the argmax row)
    trw, trh = sel(ind_is0, t0w, t1w), sel(ind_is0, t0h, t1h)
    trc = sel(ind_is0, t0c, t1c)

    # xy is taken from the argmin row and remapped to cell-relative coords.
    tmx, tmy = sel(ind0_is0, t0x, t1x), sel(ind0_is0, t0y, t1y)

    def cellrel(v):
        # torch: (xy - (ceil(xy/scale) - 1) * scale) / scale with scale = 1/7,
        # simplified to q - ceil(q) + 1 with q = 7*v (may differ from the
        # divide-by-(1/7) torch form by one ulp).
        q = v * 7.0
        return q - jnp.ceil(q) + 1.0

    trx, tr_y = cellrel(tmx), cellrel(tmy)

    # torch zeroes conf at row (i + min_index) BEFORE using it as MSE target:
    # when iou0 == iou1 that row coincides with the responsible row.
    conf_resp = jnp.where(tie, 0.0, trc)
    # non-responsible box (the other row of the cell)
    pnrc = sel(ind_is0, p1c, p0c)
    tnrc = jnp.where(tie, t1c, 0.0)   # zeroed unless tie (then row 1 unchanged)

    lxy = (prx - trx) ** 2 + (pry - tr_y) ** 2

    # sqrt(x + eps): only evaluated for object cells (guard avoids NaN * 0)
    safe = lambda v: jnp.where(obj > 0.0, v + EPS, 1.0)
    lwh = (jnp.sqrt(safe(prw)) - jnp.sqrt(safe(trw))) ** 2 \
        + (jnp.sqrt(safe(prh)) - jnp.sqrt(safe(trh))) ** 2

    lconf = (prc - conf_resp) ** 2
    lnoc = obj * (pnrc - tnrc) ** 2 \
         + noobj * ((p0c - t0c) ** 2 + (p1c - t1c) ** 2)

    # class loss: full-lane rows, cheap sublane reduce over the 20 classes
    cd = p[10:30, :] - t[10:30, :]
    lclass = jnp.sum(cd * cd, axis=0, keepdims=True)   # (1, TILE_N)

    # lane-wise accumulation into VMEM scratch (cross-lane reduce deferred)
    acc_ref[0:1, :] += obj * lxy
    acc_ref[1:2, :] += obj * lwh
    acc_ref[2:3, :] += obj * lconf
    acc_ref[3:4, :] += lnoc
    acc_ref[4:5, :] += obj * lclass

    @pl.when(i == pl.num_programs(1) - 1)
    def _():
        sums = jnp.sum(acc_ref[...], axis=1, keepdims=True)   # (8, 1)
        out_ref[...] = jnp.broadcast_to(sums, (8, 128))


@jax.jit
def yolo_loss(pre, target):
    """Equivalent of Loss.forward(pre, target). Returns (loss/batch, dict)."""
    batch = target.shape[0]
    n = batch * S * S

    # channel-major, lane-dense layout: (30, n_pad); zero padding contributes 0
    pre_cm = jnp.transpose(jnp.reshape(pre, (n, C)).astype(jnp.float32))
    tgt_cm = jnp.transpose(jnp.reshape(target, (n, C)).astype(jnp.float32))

    per = _round_up(pl.cdiv(n, NUM_PARTIALS), 128)
    tile = min(MAX_TILE, per)
    per = _round_up(per, tile)
    n_pad = NUM_PARTIALS * per
    tiles_per_partial = per // tile

    pre_cm = jnp.pad(pre_cm, ((0, 0), (0, n_pad - n)))
    tgt_cm = jnp.pad(tgt_cm, ((0, 0), (0, n_pad - n)))

    in_spec = pl.BlockSpec((C, tile),
                           lambda p, i: (0, p * tiles_per_partial + i))

    out = pl.pallas_call(
        _yolo_loss_kernel,
        out_shape=jax.ShapeDtypeStruct((NUM_PARTIALS * 8, 128), jnp.float32),
        grid=(NUM_PARTIALS, tiles_per_partial),
        in_specs=[in_spec, in_spec],
        out_specs=pl.BlockSpec((8, 128), lambda p, i: (p, 0)),
        scratch_shapes=[pltpu.VMEM((8, tile), jnp.float32)],
        compiler_params=pltpu.CompilerParams(
            dimension_semantics=("parallel", "arbitrary")),
    )(pre_cm, tgt_cm)

    # sum the per-core partials, then form the weighted total (as in torch)
    parts = jnp.sum(out.reshape(NUM_PARTIALS, 8, 128)[:, :, 0], axis=0)  # (8,)
    loss_xy, loss_wh, loss_conf, loss_noconf, loss_class = (
        parts[0], parts[1], parts[2], parts[3], parts[4])
    total = 5.0 * (loss_xy + loss_wh) + loss_class + loss_conf + 0.5 * loss_noconf
    loss = total / jnp.float32(batch)
    data = {'Sum': loss, 'Class': loss_class, 'XY': loss_xy, 'WH': loss_wh,
            'Conf': loss_conf, 'NoConf': loss_noconf}
    return loss, data


if __name__ == "__main__":
    key = jax.random.PRNGKey(0)
    k1, _ = jax.random.split(key)
    batch = 2

    # raw network output: any shape with batch * 7*7*30 elements (reshaped inside)
    pre = jax.random.uniform(k1, (batch, S * S * C), dtype=jnp.float32)

    # deterministic synthetic target: a few object cells, both boxes identical,
    # conf = 1, one-hot class; everything else zero.
    target = np.zeros((batch, S, S, C), dtype=np.float32)
    cells = [
        (0, 2, 3, 0.51, 0.37, 0.20, 0.30, 5),
        (0, 5, 1, 0.18, 0.80, 0.40, 0.25, 11),
        (1, 0, 0, 0.05, 0.09, 0.10, 0.12, 3),
        (1, 4, 6, 0.95, 0.66, 0.33, 0.44, 17),
    ]
    for b, gy, gx, x, y, w, h, cls in cells:
        bx = np.array([x, y, w, h, 1.0], dtype=np.float32)
        target[b, gy, gx, 0:5] = bx
        target[b, gy, gx, 5:10] = bx
        target[b, gy, gx, 10 + cls] = 1.0
    target = jnp.asarray(target)

    loss, data = yolo_loss(pre, target)
    jax.block_until_ready(loss)
    print("KERNEL_OK")
</pallas_src>

<mosaic_0001>
module attributes {stable_mosaic.version = 11 : i64} {
  func.func @_yolo_loss_kernel(%arg0: i32, %arg1: i32, %arg2: memref<30x128xf32, #tpu.memory_space<vmem>>, %arg3: memref<30x128xf32, #tpu.memory_space<vmem>>, %arg4: memref<8x128xf32, #tpu.memory_space<vmem>>, %arg5: memref<8x128xf32, #tpu.memory_space<vmem>>) attributes {dimension_semantics = [#tpu.dimension_semantics<parallel>, #tpu.dimension_semantics<arbitrary>], iteration_bounds = array<i64: 2, 1>, scalar_prefetch = 0 : i64, scratch_operands = 1 : i64, tpu.core_type = #tpu.core_type<tc>, window_params = [{transform_indices = @transform_0, window_bounds = array<i64: 30, 128>}, {transform_indices = @transform_1, window_bounds = array<i64: 30, 128>}, {transform_indices = @transform_2, window_bounds = array<i64: 8, 128>}]} {
    %c0_i32 = arith.constant 0 : i32
    %0 = arith.cmpi eq, %arg1, %c0_i32 : i32
    %1 = arith.extui %0 : i1 to i32
    %c0_i32_0 = arith.constant 0 : i32
    %2 = arith.cmpi ne, %1, %c0_i32_0 : i32
    scf.if %2 {
      %cst_70 = arith.constant 0.000000e+00 : f32
      %245 = vector.broadcast %cst_70 : f32 to vector<8x128xf32>
      %c0_71 = arith.constant 0 : index
      %c0_72 = arith.constant 0 : index
      %246 = vector.load %arg5[%c0_71, %c0_72] : memref<8x128xf32, #tpu.memory_space<vmem>>, vector<8x128xf32>
      tpu.vector_store %arg5[%c0_71, %c0_72], %245 {strides = array<i32>} : memref<8x128xf32, #tpu.memory_space<vmem>>, vector<8x128xf32>,
    } else {
    }
    %c0 = arith.constant 0 : index
    %c0_1 = arith.constant 0 : index
    %3 = vector.load %arg2[%c0, %c0_1] : memref<30x128xf32, #tpu.memory_space<vmem>>, vector<30x128xf32>
    %c0_2 = arith.constant 0 : index
    %c0_3 = arith.constant 0 : index
    %4 = vector.load %arg3[%c0_2, %c0_3] : memref<30x128xf32, #tpu.memory_space<vmem>>, vector<30x128xf32>
    %5 = vector.extract_strided_slice %3 {offsets = [0, 0], sizes = [1, 128], strides = [1, 1]} : vector<30x128xf32> to vector<1x128xf32>
    %6 = vector.extract_strided_slice %3 {offsets = [1, 0], sizes = [1, 128], strides = [1, 1]} : vector<30x128xf32> to vector<1x128xf32>
    %7 = vector.extract_strided_slice %3 {offsets = [2, 0], sizes = [1, 128], strides = [1, 1]} : vector<30x128xf32> to vector<1x128xf32>
    %8 = vector.extract_strided_slice %3 {offsets = [3, 0], sizes = [1, 128], strides = [1, 1]} : vector<30x128xf32> to vector<1x128xf32>
    %9 = vector.extract_strided_slice %3 {offsets = [4, 0], sizes = [1, 128], strides = [1, 1]} : vector<30x128xf32> to vector<1x128xf32>
    %10 = vector.extract_strided_slice %3 {offsets = [5, 0], sizes = [1, 128], strides = [1, 1]} : vector<30x128xf32> to vector<1x128xf32>
    %11 = vector.extract_strided_slice %3 {offsets = [6, 0], sizes = [1, 128], strides = [1, 1]} : vector<30x128xf32> to vector<1x128xf32>
    %12 = vector.extract_strided_slice %3 {offsets = [7, 0], sizes = [1, 128], strides = [1, 1]} : vector<30x128xf32> to vector<1x128xf32>
    %13 = vector.extract_strided_slice %3 {offsets = [8, 0], sizes = [1, 128], strides = [1, 1]} : vector<30x128xf32> to vector<1x128xf32>
    %14 = vector.extract_strided_slice %3 {offsets = [9, 0], sizes = [1, 128], strides = [1, 1]} : vector<30x128xf32> to vector<1x128xf32>
    %15 = vector.extract_strided_slice %4 {offsets = [0, 0], sizes = [1, 128], strides = [1, 1]} : vector<30x128xf32> to vector<1x128xf32>
    %16 = vector.extract_strided_slice %4 {offsets = [1, 0], sizes = [1, 128], strides = [1, 1]} : vector<30x128xf32> to vector<1x128xf32>
    %17 = vector.extract_strided_slice %4 {offsets = [2, 0], sizes = [1, 128], strides = [1, 1]} : vector<30x128xf32> to vector<1x128xf32>
    %18 = vector.extract_strided_slice %4 {offsets = [3, 0], sizes = [1, 128], strides = [1, 1]} : vector<30x128xf32> to vector<1x128xf32>
    %19 = vector.extract_strided_slice %4 {offsets = [4, 0], sizes = [1, 128], strides = [1, 1]} : vector<30x128xf32> to vector<1x128xf32>
    %20 = vector.extract_strided_slice %4 {offsets = [5, 0], sizes = [1, 128], strides = [1, 1]} : vector<30x128xf32> to vector<1x128xf32>
    %21 = vector.extract_strided_slice %4 {offsets = [6, 0], sizes = [1, 128], strides = [1, 1]} : vector<30x128xf32> to vector<1x128xf32>
    %22 = vector.extract_strided_slice %4 {offsets = [7, 0], sizes = [1, 128], strides = [1, 1]} : vector<30x128xf32> to vector<1x128xf32>
    %23 = vector.extract_strided_slice %4 {offsets = [8, 0], sizes = [1, 128], strides = [1, 1]} : vector<30x128xf32> to vector<1x128xf32>
    %24 = vector.extract_strided_slice %4 {offsets = [9, 0], sizes = [1, 128], strides = [1, 1]} : vector<30x128xf32> to vector<1x128xf32>
    %cst = arith.constant 0.000000e+00 : f32
    %25 = vector.broadcast %cst : f32 to vector<1x128xf32>
    %26 = arith.cmpf ogt, %19, %25 : vector<1x128xf32>
    %27 = arith.extui %26 : vector<1x128xi1> to vector<1x128xi32>
    %28 = arith.sitofp %27 : vector<1x128xi32> to vector<1x128xf32>
    %cst_4 = arith.constant 0.000000e+00 : f32
    %29 = vector.broadcast %cst_4 : f32 to vector<1x128xf32>
    %30 = arith.cmpf oeq, %19, %29 : vector<1x128xf32>
    %31 = arith.extui %30 : vector<1x128xi1> to vector<1x128xi32>
    %32 = arith.sitofp %31 : vector<1x128xi32> to vector<1x128xf32>
    %cst_5 = arith.constant 5.000000e-01 : f32
    %33 = vector.broadcast %cst_5 : f32 to vector<1x128xf32>
    %34 = arith.mulf %7, %33 : vector<1x128xf32>
    %35 = arith.subf %5, %34 : vector<1x128xf32>
    %cst_6 = arith.constant 5.000000e-01 : f32
    %36 = vector.broadcast %cst_6 : f32 to vector<1x128xf32>
    %37 = arith.mulf %7, %36 : vector<1x128xf32>
    %38 = arith.addf %5, %37 : vector<1x128xf32>
    %cst_7 = arith.constant 5.000000e-01 : f32
    %39 = vector.broadcast %cst_7 : f32 to vector<1x128xf32>
    %40 = arith.mulf %8, %39 : vector<1x128xf32>
    %41 = arith.subf %6, %40 : vector<1x128xf32>
    %cst_8 = arith.constant 5.000000e-01 : f32
    %42 = vector.broadcast %cst_8 : f32 to vector<1x128xf32>
    %43 = arith.mulf %8, %42 : vector<1x128xf32>
    %44 = arith.addf %6, %43 : vector<1x128xf32>
    %cst_9 = arith.constant 5.000000e-01 : f32
    %45 = vector.broadcast %cst_9 : f32 to vector<1x128xf32>
    %46 = arith.mulf %17, %45 : vector<1x128xf32>
    %47 = arith.subf %15, %46 : vector<1x128xf32>
    %cst_10 = arith.constant 5.000000e-01 : f32
    %48 = vector.broadcast %cst_10 : f32 to vector<1x128xf32>
    %49 = arith.mulf %17, %48 : vector<1x128xf32>
    %50 = arith.addf %15, %49 : vector<1x128xf32>
    %cst_11 = arith.constant 5.000000e-01 : f32
    %51 = vector.broadcast %cst_11 : f32 to vector<1x128xf32>
    %52 = arith.mulf %18, %51 : vector<1x128xf32>
    %53 = arith.subf %16, %52 : vector<1x128xf32>
    %cst_12 = arith.constant 5.000000e-01 : f32
    %54 = vector.broadcast %cst_12 : f32 to vector<1x128xf32>
    %55 = arith.mulf %18, %54 : vector<1x128xf32>
    %56 = arith.addf %16, %55 : vector<1x128xf32>
    %57 = arith.minimumf %38, %50 : vector<1x128xf32>
    %58 = arith.maximumf %35, %47 : vector<1x128xf32>
    %59 = arith.subf %57, %58 : vector<1x128xf32>
    %cst_13 = arith.constant 0.000000e+00 : f32
    %60 = vector.broadcast %cst_13 : f32 to vector<1x128xf32>
    %61 = arith.maximumf %59, %60 : vector<1x128xf32>
    %62 = arith.minimumf %44, %56 : vector<1x128xf32>
    %63 = arith.maximumf %41, %53 : vector<1x128xf32>
    %64 = arith.subf %62, %63 : vector<1x128xf32>
    %cst_14 = arith.constant 0.000000e+00 : f32
    %65 = vector.broadcast %cst_14 : f32 to vector<1x128xf32>
    %66 = arith.maximumf %64, %65 : vector<1x128xf32>
    %67 = arith.mulf %61, %66 : vector<1x128xf32>
    %cst_15 = arith.constant 1.000000e-07 : f32
    %68 = vector.broadcast %cst_15 : f32 to vector<1x128xf32>
    %69 = arith.addf %67, %68 : vector<1x128xf32>
    %70 = arith.subf %38, %35 : vector<1x128xf32>
    %71 = arith.subf %44, %41 : vector<1x128xf32>
    %cst_16 = arith.constant 1.000000e-07 : f32
    %72 = vector.broadcast %cst_16 : f32 to vector<1x128xf32>
    %73 = arith.addf %71, %72 : vector<1x128xf32>
    %74 = arith.subf %50, %47 : vector<1x128xf32>
    %75 = arith.subf %56, %53 : vector<1x128xf32>
    %cst_17 = arith.constant 1.000000e-07 : f32
    %76 = vector.broadcast %cst_17 : f32 to vector<1x128xf32>
    %77 = arith.addf %75, %76 : vector<1x128xf32>
    %78 = arith.mulf %70, %73 : vector<1x128xf32>
    %79 = arith.mulf %74, %77 : vector<1x128xf32>
    %80 = arith.addf %78, %79 : vector<1x128xf32>
    %81 = arith.subf %80, %69 : vector<1x128xf32>
    %cst_18 = arith.constant 1.000000e-07 : f32
    %82 = vector.broadcast %cst_18 : f32 to vector<1x128xf32>
    %83 = arith.addf %81, %82 : vector<1x128xf32>
    %84 = arith.divf %69, %83 : vector<1x128xf32>
    %cst_19 = arith.constant 5.000000e-01 : f32
    %85 = vector.broadcast %cst_19 : f32 to vector<1x128xf32>
    %86 = arith.mulf %12, %85 : vector<1x128xf32>
    %87 = arith.subf %10, %86 : vector<1x128xf32>
    %cst_20 = arith.constant 5.000000e-01 : f32
    %88 = vector.broadcast %cst_20 : f32 to vector<1x128xf32>
    %89 = arith.mulf %12, %88 : vector<1x128xf32>
    %90 = arith.addf %10, %89 : vector<1x128xf32>
    %cst_21 = arith.constant 5.000000e-01 : f32
    %91 = vector.broadcast %cst_21 : f32 to vector<1x128xf32>
    %92 = arith.mulf %13, %91 : vector<1x128xf32>
    %93 = arith.subf %11, %92 : vector<1x128xf32>
    %cst_22 = arith.constant 5.000000e-01 : f32
    %94 = vector.broadcast %cst_22 : f32 to vector<1x128xf32>
    %95 = arith.mulf %13, %94 : vector<1x128xf32>
    %96 = arith.addf %11, %95 : vector<1x128xf32>
    %cst_23 = arith.constant 5.000000e-01 : f32
    %97 = vector.broadcast %cst_23 : f32 to vector<1x128xf32>
    %98 = arith.mulf %22, %97 : vector<1x128xf32>
    %99 = arith.subf %20, %98 : vector<1x128xf32>
    %cst_24 = arith.constant 5.000000e-01 : f32
    %100 = vector.broadcast %cst_24 : f32 to vector<1x128xf32>
    %101 = arith.mulf %22, %100 : vector<1x128xf32>
    %102 = arith.addf %20, %101 : vector<1x128xf32>
    %cst_25 = arith.constant 5.000000e-01 : f32
    %103 = vector.broadcast %cst_25 : f32 to vector<1x128xf32>
    %104 = arith.mulf %23, %103 : vector<1x128xf32>
    %105 = arith.subf %21, %104 : vector<1x128xf32>
    %cst_26 = arith.constant 5.000000e-01 : f32
    %106 = vector.broadcast %cst_26 : f32 to vector<1x128xf32>
    %107 = arith.mulf %23, %106 : vector<1x128xf32>
    %108 = arith.addf %21, %107 : vector<1x128xf32>
    %109 = arith.minimumf %90, %102 : vector<1x128xf32>
    %110 = arith.maximumf %87, %99 : vector<1x128xf32>
    %111 = arith.subf %109, %110 : vector<1x128xf32>
    %cst_27 = arith.constant 0.000000e+00 : f32
    %112 = vector.broadcast %cst_27 : f32 to vector<1x128xf32>
    %113 = arith.maximumf %111, %112 : vector<1x128xf32>
    %114 = arith.minimumf %96, %108 : vector<1x128xf32>
    %115 = arith.maximumf %93, %105 : vector<1x128xf32>
    %116 = arith.subf %114, %115 : vector<1x128xf32>
    %cst_28 = arith.constant 0.000000e+00 : f32
    %117 = vector.broadcast %cst_28 : f32 to vector<1x128xf32>
    %118 = arith.maximumf %116, %117 : vector<1x128xf32>
    %119 = arith.mulf %113, %118 : vector<1x128xf32>
    %cst_29 = arith.constant 1.000000e-07 : f32
    %120 = vector.broadcast %cst_29 : f32 to vector<1x128xf32>
    %121 = arith.addf %119, %120 : vector<1x128xf32>
    %122 = arith.subf %90, %87 : vector<1x128xf32>
    %123 = arith.subf %96, %93 : vector<1x128xf32>
    %cst_30 = arith.constant 1.000000e-07 : f32
    %124 = vector.broadcast %cst_30 : f32 to vector<1x128xf32>
    %125 = arith.addf %123, %124 : vector<1x128xf32>
    %126 = arith.subf %102, %99 : vector<1x128xf32>
    %127 = arith.subf %108, %105 : vector<1x128xf32>
    %cst_31 = arith.constant 1.000000e-07 : f32
    %128 = vector.broadcast %cst_31 : f32 to vector<1x128xf32>
    %129 = arith.addf %127, %128 : vector<1x128xf32>
    %130 = arith.mulf %122, %125 : vector<1x128xf32>
    %131 = arith.mulf %126, %129 : vector<1x128xf32>
    %132 = arith.addf %130, %131 : vector<1x128xf32>
    %133 = arith.subf %132, %121 : vector<1x128xf32>
    %cst_32 = arith.constant 1.000000e-07 : f32
    %134 = vector.broadcast %cst_32 : f32 to vector<1x128xf32>
    %135 = arith.addf %133, %134 : vector<1x128xf32>
    %136 = arith.divf %121, %135 : vector<1x128xf32>
    %137 = arith.cmpf oge, %84, %136 : vector<1x128xf32>
    %138 = arith.cmpf ole, %84, %136 : vector<1x128xf32>
    %139 = arith.cmpf oeq, %84, %136 : vector<1x128xf32>
    %140 = arith.select %137, %5, %10 : vector<1x128xi1>, vector<1x128xf32>
    %141 = arith.select %137, %6, %11 : vector<1x128xi1>, vector<1x128xf32>
    %142 = arith.select %137, %7, %12 : vector<1x128xi1>, vector<1x128xf32>
    %143 = arith.select %137, %8, %13 : vector<1x128xi1>, vector<1x128xf32>
    %144 = arith.select %137, %9, %14 : vector<1x128xi1>, vector<1x128xf32>
    %145 = arith.select %137, %17, %22 : vector<1x128xi1>, vector<1x128xf32>
    %146 = arith.select %137, %18, %23 : vector<1x128xi1>, vector<1x128xf32>
    %147 = arith.select %137, %19, %24 : vector<1x128xi1>, vector<1x128xf32>
    %148 = arith.select %138, %15, %20 : vector<1x128xi1>, vector<1x128xf32>
    %149 = arith.select %138, %16, %21 : vector<1x128xi1>, vector<1x128xf32>
    %cst_33 = arith.constant 7.000000e+00 : f32
    %150 = vector.broadcast %cst_33 : f32 to vector<1x128xf32>
    %151 = arith.mulf %148, %150 : vector<1x128xf32>
    %152 = math.ceil %151 : vector<1x128xf32>
    %153 = arith.subf %151, %152 : vector<1x128xf32>
    %cst_34 = arith.constant 1.000000e+00 : f32
    %154 = vector.broadcast %cst_34 : f32 to vector<1x128xf32>
    %155 = arith.addf %153, %154 : vector<1x128xf32>
    %cst_35 = arith.constant 7.000000e+00 : f32
    %156 = vector.broadcast %cst_35 : f32 to vector<1x128xf32>
    %157 = arith.mulf %149, %156 : vector<1x128xf32>
    %158 = math.ceil %157 : vector<1x128xf32>
    %159 = arith.subf %157, %158 : vector<1x128xf32>
    %cst_36 = arith.constant 1.000000e+00 : f32
    %160 = vector.broadcast %cst_36 : f32 to vector<1x128xf32>
    %161 = arith.addf %159, %160 : vector<1x128xf32>
    %cst_37 = arith.constant 0.000000e+00 : f32
    %162 = vector.broadcast %cst_37 : f32 to vector<1x128xf32>
    %163 = arith.select %139, %162, %147 : vector<1x128xi1>, vector<1x128xf32>
    %164 = arith.select %137, %14, %9 : vector<1x128xi1>, vector<1x128xf32>
    %cst_38 = arith.constant 0.000000e+00 : f32
    %165 = vector.broadcast %cst_38 : f32 to vector<1x128xf32>
    %166 = arith.select %139, %24, %165 : vector<1x128xi1>, vector<1x128xf32>
    %167 = arith.subf %140, %155 : vector<1x128xf32>
    %168 = arith.mulf %167, %167 : vector<1x128xf32>
    %169 = arith.subf %141, %161 : vector<1x128xf32>
    %170 = arith.mulf %169, %169 : vector<1x128xf32>
    %171 = arith.addf %168, %170 : vector<1x128xf32>
    %cst_39 = arith.constant 0.000000e+00 : f32
    %172 = vector.broadcast %cst_39 : f32 to vector<1x128xf32>
    %173 = arith.cmpf ogt, %28, %172 : vector<1x128xf32>
    %cst_40 = arith.constant 1.000000e-07 : f32
    %174 = vector.broadcast %cst_40 : f32 to vector<1x128xf32>
    %175 = arith.addf %142, %174 : vector<1x128xf32>
    %cst_41 = arith.constant 1.000000e+00 : f32
    %176 = vector.broadcast %cst_41 : f32 to vector<1x128xf32>
    %177 = arith.select %173, %175, %176 : vector<1x128xi1>, vector<1x128xf32>
    %178 = math.sqrt %177 : vector<1x128xf32>
    %cst_42 = arith.constant 0.000000e+00 : f32
    %179 = vector.broadcast %cst_42 : f32 to vector<1x128xf32>
    %180 = arith.cmpf ogt, %28, %179 : vector<1x128xf32>
    %cst_43 = arith.constant 1.000000e-07 : f32
    %181 = vector.broadcast %cst_43 : f32 to vector<1x128xf32>
    %182 = arith.addf %145, %181 : vector<1x128xf32>
    %cst_44 = arith.constant 1.000000e+00 : f32
    %183 = vector.broadcast %cst_44 : f32 to vector<1x128xf32>
    %184 = arith.select %180, %182, %183 : vector<1x128xi1>, vector<1x128xf32>
    %185 = math.sqrt %184 : vector<1x128xf32>
    %186 = arith.subf %178, %185 : vector<1x128xf32>
    %187 = arith.mulf %186, %186 : vector<1x128xf32>
    %cst_45 = arith.constant 0.000000e+00 : f32
    %188 = vector.broadcast %cst_45 : f32 to vector<1x128xf32>
    %189 = arith.cmpf ogt, %28, %188 : vector<1x128xf32>
    %cst_46 = arith.constant 1.000000e-07 : f32
    %190 = vector.broadcast %cst_46 : f32 to vector<1x128xf32>
    %191 = arith.addf %143, %190 : vector<1x128xf32>
    %cst_47 = arith.constant 1.000000e+00 : f32
    %192 = vector.broadcast %cst_47 : f32 to vector<1x128xf32>
    %193 = arith.select %189, %191, %192 : vector<1x128xi1>, vector<1x128xf32>
    %194 = math.sqrt %193 : vector<1x128xf32>
    %cst_48 = arith.constant 0.000000e+00 : f32
    %195 = vector.broadcast %cst_48 : f32 to vector<1x128xf32>
    %196 = arith.cmpf ogt, %28, %195 : vector<1x128xf32>
    %cst_49 = arith.constant 1.000000e-07 : f32
    %197 = vector.broadcast %cst_49 : f32 to vector<1x128xf32>
    %198 = arith.addf %146, %197 : vector<1x128xf32>
    %cst_50 = arith.constant 1.000000e+00 : f32
    %199 = vector.broadcast %cst_50 : f32 to vector<1x128xf32>
    %200 = arith.select %196, %198, %199 : vector<1x128xi1>, vector<1x128xf32>
    %201 = math.sqrt %200 : vector<1x128xf32>
    %202 = arith.subf %194, %201 : vector<1x128xf32>
    %203 = arith.mulf %202, %202 : vector<1x128xf32>
    %204 = arith.addf %187, %203 : vector<1x128xf32>
    %205 = arith.subf %144, %163 : vector<1x128xf32>
    %206 = arith.mulf %205, %205 : vector<1x128xf32>
    %207 = arith.subf %164, %166 : vector<1x128xf32>
    %208 = arith.mulf %207, %207 : vector<1x128xf32>
    %209 = arith.mulf %28, %208 : vector<1x128xf32>
    %210 = arith.subf %9, %19 : vector<1x128xf32>
    %211 = arith.mulf %210, %210 : vector<1x128xf32>
    %212 = arith.subf %14, %24 : vector<1x128xf32>
    %213 = arith.mulf %212, %212 : vector<1x128xf32>
    %214 = arith.addf %211, %213 : vector<1x128xf32>
    %215 = arith.mulf %32, %214 : vector<1x128xf32>
    %216 = arith.addf %209, %215 : vector<1x128xf32>
    %217 = vector.extract_strided_slice %3 {offsets = [10, 0], sizes = [20, 128], strides = [1, 1]} : vector<30x128xf32> to vector<20x128xf32>
    %218 = vector.extract_strided_slice %4 {offsets = [10, 0], sizes = [20, 128], strides = [1, 1]} : vector<30x128xf32> to vector<20x128xf32>
    %219 = arith.subf %217, %218 : vector<20x128xf32>
    %220 = arith.mulf %219, %219 : vector<20x128xf32>
    %cst_51 = arith.constant dense<0.000000e+00> : vector<128xf32>
    %221 = vector.multi_reduction <add>, %220, %cst_51 [0] : vector<20x128xf32> to vector<128xf32>
    %222 = vector.shape_cast %221 : vector<128xf32> to vector<1x128xf32>
    %c0_52 = arith.constant 0 : index
    %c0_53 = arith.constant 0 : index
    %223 = vector.load %arg5[%c0_52, %c0_53] : memref<8x128xf32, #tpu.memory_space<vmem>>, vector<1x128xf32>
    %224 = arith.mulf %28, %171 : vector<1x128xf32>
    %225 = arith.addf %223, %224 : vector<1x128xf32>
    %c0_54 = arith.constant 0 : index
    %c0_55 = arith.constant 0 : index
    %226 = vector.load %arg5[%c0_54, %c0_55] : memref<8x128xf32, #tpu.memory_space<vmem>>, vector<1x128xf32>
    tpu.vector_store %arg5[%c0_54, %c0_55], %225 {strides = array<i32>} : memref<8x128xf32, #tpu.memory_space<vmem>>, vector<1x128xf32>,
    %c1 = arith.constant 1 : index
    %c0_56 = arith.constant 0 : index
    %227 = vector.load %arg5[%c1, %c0_56] : memref<8x128xf32, #tpu.memory_space<vmem>>, vector<1x128xf32>
    %228 = arith.mulf %28, %204 : vector<1x128xf32>
    %229 = arith.addf %227, %228 : vector<1x128xf32>
    %c1_57 = arith.constant 1 : index
    %c0_58 = arith.constant 0 : index
    %230 = vector.load %arg5[%c1_57, %c0_58] : memref<8x128xf32, #tpu.memory_space<vmem>>, vector<1x128xf32>
    tpu.vector_store %arg5[%c1_57, %c0_58], %229 {strides = array<i32>} : memref<8x128xf32, #tpu.memory_space<vmem>>, vector<1x128xf32>,
    %c2 = arith.constant 2 : index
    %c0_59 = arith.constant 0 : index
    %231 = vector.load %arg5[%c2, %c0_59] : memref<8x128xf32, #tpu.memory_space<vmem>>, vector<1x128xf32>
    %232 = arith.mulf %28, %206 : vector<1x128xf32>
    %233 = arith.addf %231, %232 : vector<1x128xf32>
    %c2_60 = arith.constant 2 : index
    %c0_61 = arith.constant 0 : index
    %234 = vector.load %arg5[%c2_60, %c0_61] : memref<8x128xf32, #tpu.memory_space<vmem>>, vector<1x128xf32>
    tpu.vector_store %arg5[%c2_60, %c0_61], %233 {strides = array<i32>} : memref<8x128xf32, #tpu.memory_space<vmem>>, vector<1x128xf32>,
    %c3 = arith.constant 3 : index
    %c0_62 = arith.constant 0 : index
    %235 = vector.load %arg5[%c3, %c0_62] : memref<8x128xf32, #tpu.memory_space<vmem>>, vector<1x128xf32>
    %236 = arith.addf %235, %216 : vector<1x128xf32>
    %c3_63 = arith.constant 3 : index
    %c0_64 = arith.constant 0 : index
    %237 = vector.load %arg5[%c3_63, %c0_64] : memref<8x128xf32, #tpu.memory_space<vmem>>, vector<1x128xf32>
    tpu.vector_store %arg5[%c3_63, %c0_64], %236 {strides = array<i32>} : memref<8x128xf32, #tpu.memory_space<vmem>>, vector<1x128xf32>,
    %c4 = arith.constant 4 : index
    %c0_65 = arith.constant 0 : index
    %238 = vector.load %arg5[%c4, %c0_65] : memref<8x128xf32, #tpu.memory_space<vmem>>, vector<1x128xf32>
    %239 = arith.mulf %28, %222 : vector<1x128xf32>
    %240 = arith.addf %238, %239 : vector<1x128xf32>
    %c4_66 = arith.constant 4 : index
    %c0_67 = arith.constant 0 : index
    %241 = vector.load %arg5[%c4_66, %c0_67] : memref<8x128xf32, #tpu.memory_space<vmem>>, vector<1x128xf32>
    tpu.vector_store %arg5[%c4_66, %c0_67], %240 {strides = array<i32>} : memref<8x128xf32, #tpu.memory_space<vmem>>, vector<1x128xf32>,
    %c0_i32_68 = arith.constant 0 : i32
    %242 = arith.cmpi eq, %arg1, %c0_i32_68 : i32
    %243 = arith.extui %242 : i1 to i32
    %c0_i32_69 = arith.constant 0 : i32
    %244 = arith.cmpi ne, %243, %c0_i32_69 : i32
    scf.if %244 {
      %c0_70 = arith.constant 0 : index
      %c0_71 = arith.constant 0 : index
      %245 = vector.load %arg5[%c0_70, %c0_71] : memref<8x128xf32, #tpu.memory_space<vmem>>, vector<8x128xf32>
      %cst_72 = arith.constant dense<0.000000e+00> : vector<8xf32>
      %246 = vector.multi_reduction <add>, %245, %cst_72 [1] : vector<8x128xf32> to vector<8xf32>
      %247 = vector.shape_cast %246 : vector<8xf32> to vector<8x1xf32>
      %248 = vector.shape_cast %247 : vector<8x1xf32> to vector<8x1xf32>
      %249 = vector.broadcast %248 : vector<8x1xf32> to vector<8x128xf32>
      %c0_73 = arith.constant 0 : index
      %c0_74 = arith.constant 0 : index
      %250 = vector.load %arg4[%c0_73, %c0_74] : memref<8x128xf32, #tpu.memory_space<vmem>>, vector<8x128xf32>
      tpu.vector_store %arg4[%c0_73, %c0_74], %249 {strides = array<i32>} : memref<8x128xf32, #tpu.memory_space<vmem>>, vector<8x128xf32>,
    } else {
    }
    return
  }
  func.func @transform_0(%arg0: i32, %arg1: i32) -> (i32, i32) {
    %c1_i32 = arith.constant 1 : i32
    %0 = arith.muli %arg0, %c1_i32 : i32
    %1 = arith.addi %0, %arg1 : i32
    %c0_i32 = arith.constant 0 : i32
    %c0_i32_0 = arith.constant 0 : i32
    return %c0_i32, %1 : i32, i32
  }
  func.func @transform_1(%arg0: i32, %arg1: i32) -> (i32, i32) {
    %c1_i32 = arith.constant 1 : i32
    %0 = arith.muli %arg0, %c1_i32 : i32
    %1 = arith.addi %0, %arg1 : i32
    %c0_i32 = arith.constant 0 : i32
    %c0_i32_0 = arith.constant 0 : i32
    return %c0_i32, %1 : i32, i32
  }
  func.func @transform_2(%arg0: i32, %arg1: i32) -> (i32, i32) {
    %c0_i32 = arith.constant 0 : i32
    %c0_i32_0 = arith.constant 0 : i32
    return %arg0, %c0_i32 : i32, i32
  }
}

</mosaic_0001>

<llo_original>
// kernel: yolo_loss.1
$region0: #{yolo_loss.1}
  #allocation0 [shape = 'u32[]', space=smem, size = 0x4, offset = 0x4, fixed_abs, tag = 'smem constant byte address 0x4 - core index']
  #allocation1 [shape = 'u32[72,128]{1,0:T(1,128)}', space=vmem, size = 0x9000, scoped, tag = 'internal scratch']
  #allocation2 [shape = 'f32[8,128]{1,0:T(8,128)}', space=vmem, size = 0x1000, scoped, tag = 'scratch operand']
  %s0 = inlined_call_operand.vmem [shape: f32[30,256], index: 0, kind: input, shape index: {}]
  %s1 = inlined_call_operand.vmem [shape: f32[30,256], index: 1, kind: input, shape index: {}]
  %s2 = inlined_call_operand.vmem [shape: f32[16,128], index: 2, kind: output, shape index: {}]
  %s3 = sld [smem:[#allocation0]]
  $region125: #{yolo_loss.1} parent=0
    _
  %s5 = ssub.s32 1, %s3
  %s6 = scalar_select 0, %s5, %s3
  $region1: #{yolo_loss.1} parent=0
    #allocation3 [shape = 'u8[32768]{0}', space=vmem, size = 0x8000, scoped, tag = 'input window, operand 0']
    #allocation4 [shape = 'u8[32768]{0}', space=vmem, size = 0x8000, scoped, tag = 'input window, operand 1']
    loop: start=0, step=1, limit=4
    $region2: #{yolo_loss.1} parent=1 // loop_pre_header
      _
    $region3: #{yolo_loss.1} parent=1 // loop_header
      %s8 = sphi 0, %s12
      %p9 = scmp.ge.s32.totalorder %s8, 4
      %s15 = sphi 0, %s27
      %s16 = sphi 0, %s23
      %s17 = sphi 0, %s15
      %s18 = sphi 0, %s16
      %s19 = sphi 0, %s17
      %s20 = sphi 0, %s18
      %s32 = sphi 0, %s34
      %s35 = sphi 0, %s32
      %s36 = sphi 0, %s35
      %s52 = sphi 0, %s36
      %s60 = sphi 0, %s62
      %s63 = sphi 0, %s60
      %s64 = sphi 0, %s63
      %s80 = sphi 0, %s64
      %s86 = sphi 0, %s88
      %s89 = sphi 0, %s86
      %s90 = sphi 0, %s89
      %s106 = sphi 0, %s90
    $region4: #{yolo_loss.1} parent=1 // loop_header_branch
      %11 = sbr.rel (%p9) target = $region8
    $region5: #{yolo_loss.1} parent=1 // loop_body
      %s13 = ssub.s32 %s8, 1
      %s14 = ssub.s32 %s8, 2
      %s21 = sadd.s32 1, %s16
      %p22 = scmp.ge.s32.totalorder %s21, 1
      %s23 = scalar_select %p22, 0, %s21
      %s24 = sadd.s32 1, %s15
      %s25 = scalar_select %p22, %s24, %s15
      %p26 = scmp.ge.s32.totalorder %s25, 2
      %s27 = scalar_select %p26, 0, %s25
      %s28 = sadd.s32 %s15, %s16
      %s29 = sadd.s32 %s27, %s23
      %s30 = ssub.s32 %s28, %s29
      %p31 = scmp.eq.s32.totalorder %s30, 0
      %s33 = sadd.s32 %s32, 1
      %s34 = scalar_select %p31, %s32, %s33
      %p37 = pneg %p31
      %p38 = scmp.eq.s32.totalorder %s8, 1
      %p39 = por %p37, %p38
      %p40 = scmp.ne.s32.totalorder %s32, %s35
      %p41 = scmp.eq.s32.totalorder %s8, 0
      %p42 = por %p40, %p41
      %p43 = scmp.ne.s32.totalorder %s32, %s35
      %p44 = scmp.eq.s32.totalorder %s13, 1
      %p45 = por %p43, %p44
      %p46 = scmp.ne.s32.totalorder %s35, %s36
      %p47 = scmp.eq.s32.totalorder %s13, 0
      %p48 = por %p46, %p47
      %p49 = scmp.ne.s32.totalorder %s35, %s36
      %p50 = scmp.eq.s32.totalorder %s14, 1
      %p51 = por %p49, %p50
      %p53 = scmp.ne.s32.totalorder %s36, %s52
      %p54 = scmp.eq.s32.totalorder %s14, 0
      %p55 = por %p53, %p54
      %s56 = sadd.s32 %s15, %s16
      %s57 = sadd.s32 %s27, %s23
      %s58 = ssub.s32 %s56, %s57
      %p59 = scmp.eq.s32.totalorder %s58, 0
      %s61 = sadd.s32 %s60, 1
      %s62 = scalar_select %p59, %s60, %s61
      %p65 = pneg %p59
      %p66 = scmp.eq.s32.totalorder %s8, 1
      %p67 = por %p65, %p66
      %p68 = scmp.ne.s32.totalorder %s60, %s63
      %p69 = scmp.eq.s32.totalorder %s8, 0
      %p70 = por %p68, %p69
      %p71 = scmp.ne.s32.totalorder %s60, %s63
      %p72 = scmp.eq.s32.totalorder %s13, 1
      %p73 = por %p71, %p72
      %p74 = scmp.ne.s32.totalorder %s63, %s64
      %p75 = scmp.eq.s32.totalorder %s13, 0
      %p76 = por %p74, %p75
      %p77 = scmp.ne.s32.totalorder %s63, %s64
      %p78 = scmp.eq.s32.totalorder %s14, 1
      %p79 = por %p77, %p78
      %p81 = scmp.ne.s32.totalorder %s64, %s80
      %p82 = scmp.eq.s32.totalorder %s14, 0
      %p83 = por %p81, %p82
      %s84 = ssub.s32 %s15, %s27
      %p85 = scmp.eq.s32.totalorder %s84, 0
      %s87 = sadd.s32 %s86, 1
      %s88 = scalar_select %p85, %s86, %s87
      %p91 = pneg %p85
      %p92 = scmp.eq.s32.totalorder %s8, 1
      %p93 = por %p91, %p92
      %p94 = scmp.ne.s32.totalorder %s86, %s89
      %p95 = scmp.eq.s32.totalorder %s8, 0
      %p96 = por %p94, %p95
      %p97 = scmp.ne.s32.totalorder %s86, %s89
      %p98 = scmp.eq.s32.totalorder %s13, 1
      %p99 = por %p97, %p98
      %p100 = scmp.ne.s32.totalorder %s89, %s90
      %p101 = scmp.eq.s32.totalorder %s13, 0
      %p102 = por %p100, %p101
      %p103 = scmp.ne.s32.totalorder %s89, %s90
      %p104 = scmp.eq.s32.totalorder %s14, 1
      %p105 = por %p103, %p104
      %p107 = scmp.ne.s32.totalorder %s90, %s106
      %p108 = scmp.eq.s32.totalorder %s14, 0
      %p109 = por %p107, %p108
      %p110 = scmp.le.s32.totalorder 1, %s8
      %p111 = scmp.lt.s32.totalorder %s8, 3
      %p112 = pnand %p110, %p111
      %p113 = pneg %p112
      // Predicated region
      $region9: #{yolo_loss.1} parent=5 // pred_check
        _
      $region10: #{yolo_loss.1} parent=5 // pred_check_branch
        %115 = sbr.rel (%p112) target = $region12
      $region11: #{yolo_loss.1} parent=5 // pred_region
        %s116 = ssub.s32 %s8, 1
      $region12: #{yolo_loss.1} parent=5 // pred_fallthru
        _
      %p117 = scmp.lt.s32.totalorder %s8, 2
      // Predicated region
      $region13: #{yolo_loss.1} parent=5 // pred_check
        %p118 = pneg %p117
      $region14: #{yolo_loss.1} parent=5 // pred_check_branch
        %120 = sbr.rel (%p118) target = $region16
      $region15: #{yolo_loss.1} parent=5 // pred_region
        // Predicated region
        $region17: #{yolo_loss.1} parent=15 // pred_check
          %p121 = pneg %p42
        $region18: #{yolo_loss.1} parent=15 // pred_check_branch
          %123 = sbr.rel (%p121) target = $region20
        $region19: #{yolo_loss.1} parent=15 // pred_region
          %s124 = sand.u32 %s32, 1
          %s125 = sand.u32 %s32, 1
          %s126 = smul.addr %s125, 32
          %s127 = scalar_lea.vmem [#allocation3], %s126
          %s128 = sadd.s32 %s15, %s16
          %s129 = smul.addr %s128, 8
          %s130 = scalar_lea.vmem %s0, %s129
          // Predicated region
          $region21: #{yolo_loss.1} parent=19 // pred_check
            _
          $region22: #{yolo_loss.1} parent=19 // pred_check_branch
            %132 = sbr.rel (0) target = $region24
          $region23: #{yolo_loss.1} parent=19 // pred_region
            // Predicated region
            $region25: #{yolo_loss.1} parent=23 // pred_check
              _
            $region26: #{yolo_loss.1} parent=23 // pred_check_branch
              %134 = sbr.rel (0) target = $region28
            $region27: #{yolo_loss.1} parent=23 // pred_region
              // Predicated region
              $region40: #{yolo_loss.1} parent=27 // pred_check
                _
              $region41: #{yolo_loss.1} parent=27 // pred_check_branch
                %156 = sbr.rel (0) target = $region43
              $region42: #{yolo_loss.1} parent=27 // pred_region
                loop: start=0, step=1, limit=1
                $region44: #{yolo_loss.1} parent=42 // loop_pre_header
                  _
                $region45: #{yolo_loss.1} parent=42 // loop_header
                  %s158 = sphi 0, %s162
                  %p159 = scmp.ge.s32.totalorder %s158, 1
                  %s163 = sphi %s130, %s130
                  %s164 = sphi %s127, %s127
                $region46: #{yolo_loss.1} parent=42 // loop_header_branch
                  %161 = sbr.rel (%p159) target = $region50
                $region47: #{yolo_loss.1} parent=42 // loop_body
                  %v165 = vld [vmem:[%s163] sm:$0xff]
                  %166 = vst [vmem:[%s164] sm:$0xff] %v165
                  %v167 = vld [vmem:[%s163 + $0x10] sm:$0xff]
                  %168 = vst [vmem:[%s164 + $0x8] sm:$0xff] %v167
                  %v169 = vld [vmem:[%s163 + $0x20] sm:$0xff]
                  %170 = vst [vmem:[%s164 + $0x10] sm:$0xff] %v169
                  %v171 = vld [vmem:[%s163 + $0x30] sm:$0xff]
                  %172 = vst [vmem:[%s164 + $0x18] sm:$0xff] %v171
                $region48: #{yolo_loss.1} parent=42 // loop_footer
                  %s162 = sadd.s32 1, %s158
                $region49: #{yolo_loss.1} parent=42 // loop_footer_branch
                  %157 = sbr.rel target = $region45
                $region50: #{yolo_loss.1} parent=42 // loop_exit
                  _
              $region43: #{yolo_loss.1} parent=27 // pred_fallthru
                _
              // Predicated region
              $region51: #{yolo_loss.1} parent=27 // pred_check
                _
              $region52: #{yolo_loss.1} parent=27 // pred_check_branch
                %174 = sbr.rel target = $region54
              $region53: #{yolo_loss.1} parent=27 // pred_region
                _
              $region54: #{yolo_loss.1} parent=27 // pred_fallthru
                _
            $region28: #{yolo_loss.1} parent=23 // pred_fallthru
              _
            // Predicated region
            $region29: #{yolo_loss.1} parent=23 // pred_check
              _
            $region30: #{yolo_loss.1} parent=23 // pred_check_branch
              %136 = sbr.rel target = $region32
            $region31: #{yolo_loss.1} parent=23 // pred_region
              %s138 = ssub.s32 256, 1
              loop: start=0, step=1, limit=1
              $region33: #{yolo_loss.1} parent=31 // loop_pre_header
                _
              $region34: #{yolo_loss.1} parent=31 // loop_header
                %s140 = sphi 0, %s144
                %p141 = scmp.ge.s32.totalorder %s140, 1
                %s145 = sphi %s130, %s130
                %s146 = sphi %s127, %s127
              $region35: #{yolo_loss.1} parent=31 // loop_header_branch
                %143 = sbr.rel (%p141) target = $region39
              $region36: #{yolo_loss.1} parent=31 // loop_body
                %v147 = vld [vmem:[%s145] sm:%s138]
                %148 = vst [vmem:[%s146] sm:%s138] %v147
                %v149 = vld [vmem:[%s145 + $0x10] sm:%s138]
                %150 = vst [vmem:[%s146 + $0x8] sm:%s138] %v149
                %v151 = vld [vmem:[%s145 + $0x20] sm:%s138]
                %152 = vst [vmem:[%s146 + $0x10] sm:%s138] %v151
                %v153 = vld [vmem:[%s145 + $0x30] sm:%s138]
                %154 = vst [vmem:[%s146 + $0x18] sm:%s138] %v153
              $region37: #{yolo_loss.1} parent=31 // loop_footer
                %s144 = sadd.s32 1, %s140
              $region38: #{yolo_loss.1} parent=31 // loop_footer_branch
                %139 = sbr.rel target = $region34
              $region39: #{yolo_loss.1} parent=31 // loop_exit
                _
            $region32: #{yolo_loss.1} parent=23 // pred_fallthru
              _
          $region24: #{yolo_loss.1} parent=19 // pred_fallthru
            _
          %175 = vnop
        $region20: #{yolo_loss.1} parent=15 // pred_fallthru
          _
        // Predicated region
        $region55: #{yolo_loss.1} parent=15 // pred_check
          %p176 = pneg %p70
        $region56: #{yolo_loss.1} parent=15 // pred_check_branch
          %178 = sbr.rel (%p176) target = $region58
        $region57: #{yolo_loss.1} parent=15 // pred_region
          %s179 = sand.u32 %s60, 1
          %s180 = sand.u32 %s60, 1
          %s181 = smul.addr %s180, 32
          %s182 = scalar_lea.vmem [#allocation4], %s181
          %s183 = sadd.s32 %s15, %s16
          %s184 = smul.addr %s183, 8
          %s185 = scalar_lea.vmem %s1, %s184
          // Predicated region
          $region59: #{yolo_loss.1} parent=57 // pred_check
            _
          $region60: #{yolo_loss.1} parent=57 // pred_check_branch
            %187 = sbr.rel (0) target = $region62
          $region61: #{yolo_loss.1} parent=57 // pred_region
            // Predicated region
            $region63: #{yolo_loss.1} parent=61 // pred_check
              _
            $region64: #{yolo_loss.1} parent=61 // pred_check_branch
              %189 = sbr.rel (0) target = $region66
            $region65: #{yolo_loss.1} parent=61 // pred_region
              // Predicated region
              $region78: #{yolo_loss.1} parent=65 // pred_check
                _
              $region79: #{yolo_loss.1} parent=65 // pred_check_branch
                %211 = sbr.rel (0) target = $region81
              $region80: #{yolo_loss.1} parent=65 // pred_region
                loop: start=0, step=1, limit=1
                $region82: #{yolo_loss.1} parent=80 // loop_pre_header
                  _
                $region83: #{yolo_loss.1} parent=80 // loop_header
                  %s213 = sphi 0, %s217
                  %p214 = scmp.ge.s32.totalorder %s213, 1
                  %s218 = sphi %s185, %s185
                  %s219 = sphi %s182, %s182
                $region84: #{yolo_loss.1} parent=80 // loop_header_branch
                  %216 = sbr.rel (%p214) target = $region88
                $region85: #{yolo_loss.1} parent=80 // loop_body
                  %v220 = vld [vmem:[%s218] sm:$0xff]
                  %221 = vst [vmem:[%s219] sm:$0xff] %v220
                  %v222 = vld [vmem:[%s218 + $0x10] sm:$0xff]
                  %223 = vst [vmem:[%s219 + $0x8] sm:$0xff] %v222
                  %v224 = vld [vmem:[%s218 + $0x20] sm:$0xff]
                  %225 = vst [vmem:[%s219 + $0x10] sm:$0xff] %v224
                  %v226 = vld [vmem:[%s218 + $0x30] sm:$0xff]
                  %227 = vst [vmem:[%s219 + $0x18] sm:$0xff] %v226
                $region86: #{yolo_loss.1} parent=80 // loop_footer
                  %s217 = sadd.s32 1, %s213
                $region87: #{yolo_loss.1} parent=80 // loop_footer_branch
                  %212 = sbr.rel target = $region83
                $region88: #{yolo_loss.1} parent=80 // loop_exit
                  _
              $region81: #{yolo_loss.1} parent=65 // pred_fallthru
                _
              // Predicated region
              $region89: #{yolo_loss.1} parent=65 // pred_check
                _
              $region90: #{yolo_loss.1} parent=65 // pred_check_branch
                %229 = sbr.rel target = $region92
              $region91: #{yolo_loss.1} parent=65 // pred_region
                _
              $region92: #{yolo_loss.1} parent=65 // pred_fallthru
                _
            $region66: #{yolo_loss.1} parent=61 // pred_fallthru
              _
            // Predicated region
            $region67: #{yolo_loss.1} parent=61 // pred_check
              _
            $region68: #{yolo_loss.1} parent=61 // pred_check_branch
              %191 = sbr.rel target = $region70
            $region69: #{yolo_loss.1} parent=61 // pred_region
              %s193 = ssub.s32 256, 1
              loop: start=0, step=1, limit=1
              $region71: #{yolo_loss.1} parent=69 // loop_pre_header
                _
              $region72: #{yolo_loss.1} parent=69 // loop_header
                %s195 = sphi 0, %s199
                %p196 = scmp.ge.s32.totalorder %s195, 1
                %s200 = sphi %s185, %s185
                %s201 = sphi %s182, %s182
              $region73: #{yolo_loss.1} parent=69 // loop_header_branch
                %198 = sbr.rel (%p196) target = $region77
              $region74: #{yolo_loss.1} parent=69 // loop_body
                %v202 = vld [vmem:[%s200] sm:%s193]
                %203 = vst [vmem:[%s201] sm:%s193] %v202
                %v204 = vld [vmem:[%s200 + $0x10] sm:%s193]
                %205 = vst [vmem:[%s201 + $0x8] sm:%s193] %v204
                %v206 = vld [vmem:[%s200 + $0x20] sm:%s193]
                %207 = vst [vmem:[%s201 + $0x10] sm:%s193] %v206
                %v208 = vld [vmem:[%s200 + $0x30] sm:%s193]
                %209 = vst [vmem:[%s201 + $0x18] sm:%s193] %v208
              $region75: #{yolo_loss.1} parent=69 // loop_footer
                %s199 = sadd.s32 1, %s195
              $region76: #{yolo_loss.1} parent=69 // loop_footer_branch
                %194 = sbr.rel target = $region72
              $region77: #{yolo_loss.1} parent=69 // loop_exit
                _
            $region70: #{yolo_loss.1} parent=61 // pred_fallthru
              _
          $region62: #{yolo_loss.1} parent=57 // pred_fallthru
            _
          %230 = vnop
        $region58: #{yolo_loss.1} parent=15 // pred_fallthru
          _
      $region16: #{yolo_loss.1} parent=5 // pred_fallthru
        _
      %p231 = scmp.le.s32.totalorder 1, %s8
      %p232 = scmp.lt.s32.totalorder %s8, 3
      %p233 = pnand %p231, %p232
      %p234 = pneg %p233
      // Predicated region
      $region93: #{yolo_loss.1} parent=5 // pred_check
        _
      $region94: #{yolo_loss.1} parent=5 // pred_check_branch
        %236 = sbr.rel (%p233) target = $region96
      $region95: #{yolo_loss.1} parent=5 // pred_region
        %s237 = ssub.s32 %s8, 1
        %s238 = sand.u32 %s35, 1
        %s239 = sand.u32 %s35, 1
        %s240 = smul.addr %s239, 32
        %s241 = scalar_lea.vmem [#allocation3], %s240
        // Predicated region
        $region97: #{yolo_loss.1} parent=95 // pred_check
          %p242 = pneg %p48
        $region98: #{yolo_loss.1} parent=95 // pred_check_branch
          %244 = sbr.rel (%p242) target = $region100
        $region99: #{yolo_loss.1} parent=95 // pred_region
          _
        $region100: #{yolo_loss.1} parent=95 // pred_fallthru
          _
        %s245 = sand.u32 %s63, 1
        %s246 = sand.u32 %s63, 1
        %s247 = smul.addr %s246, 32
        %s248 = scalar_lea.vmem [#allocation4], %s247
        // Predicated region
        $region101: #{yolo_loss.1} parent=95 // pred_check
          %p249 = pneg %p76
        $region102: #{yolo_loss.1} parent=95 // pred_check_branch
          %251 = sbr.rel (%p249) target = $region104
        $region103: #{yolo_loss.1} parent=95 // pred_region
          _
        $region104: #{yolo_loss.1} parent=95 // pred_fallthru
          _
        %s252 = sand.u32 %s35, 1
        %s253 = sand.u32 %s35, 1
        %s254 = smul.addr %s253, 32
        %s255 = scalar_lea.vmem [#allocation3], %s254
        %p256 = pneg %p48
        %p257 = pneg %p45
        %s258 = sand.u32 %s63, 1
        %s259 = sand.u32 %s63, 1
        %s260 = smul.addr %s259, 32
        %s261 = scalar_lea.vmem [#allocation4], %s260
        %p262 = pneg %p76
        %p263 = pneg %p73
        %p264 = pneg %p102
        %p265 = pneg %p99
        %p266 = scmp.lt.s32.totalorder %s17, 1
        %s267 = scalar_select %p266, %s17, 1
        %s268 = smul.addr %s267, 8
        %s269 = scalar_lea.vmem %s2, %s268
        %s270 = sadd.s32 %s17, %s18
        %s271 = sadd.s32 %s17, %s18
        %p272 = scmp.lt.s32.totalorder %s17, 1
        %s273 = scalar_select %p272, %s17, 1
        %s274 = smul.addr %s273, 8
        %s275 = scalar_lea.vmem %s2, %s274
        %p276 = scmp.eq.s32.totalorder %s18, 0
        // Predicated region
        $region105: #{yolo_loss.1} parent=95 // pred_check
          %p277 = pneg %p276
        $region106: #{yolo_loss.1} parent=95 // pred_check_branch
          %279 = sbr.rel (%p277) target = $region108
        $region107: #{yolo_loss.1} parent=95 // pred_region
          %280 = vst [vmem:[#allocation2] sm:$0xff] 0.0
        $region108: #{yolo_loss.1} parent=95 // pred_fallthru
          _
        %v281 = vld [vmem:[%s241] sm:$0xff]
        %v282 = vld [vmem:[%s241 + $0x8] sm:$0xff]
        %v283 = vld [vmem:[%s241 + $0x10] sm:$0xff]
        %v284 = vld [vmem:[%s241 + $0x18] sm:$0x3f]
        %v285 = vld [vmem:[%s248] sm:$0xff]
        %v286 = vld [vmem:[%s248 + $0x8] sm:$0xff]
        %v287 = vld [vmem:[%s248 + $0x10] sm:$0xff]
        %v288 = vld [vmem:[%s248 + $0x18] sm:$0x3f]
        %vm289 = vcmp.gt.f32.partialorder %v285, 0.0
        %v290 = vsel %vm289, 1, 0
        %v291 = vcvt.s32.f32 %v290
        %vm292 = vcmp.eq.f32.partialorder %v285, 0.0
        %v293 = vsel %vm292, 1, 0
        %v294 = vcvt.s32.f32 %v293
        %v295 = vmul.f32 %v281, 0.5
        %v297 = vrot.slane %v295, 2
        %v299 = vsub.f32 %v281, %v297
        %v300 = vadd.f32 %v281, %v297
        %v301 = vmul.f32 %v285, 0.5
        %v303 = vrot.slane %v301, 2
        %v305 = vsub.f32 %v285, %v303
        %v306 = vadd.f32 %v285, %v303
        %v307 = vmin.f32 %v300, %v306
        %v308 = vmax.f32 %v299, %v305
        %v309 = vsub.f32 %v307, %v308
        %v310 = vmax.f32 %v309, 0.0
        %v312 = vrot.slane %v310, 1
        %v314 = vmul.f32 %v310, %v312
        %v315 = vadd.f32 %v314, 1e-07
        %v316 = vsub.f32 %v300, %v299
        %v317 = vadd.f32 %v316, 1e-07
        %v318 = vsub.f32 %v306, %v305
        %v319 = vadd.f32 %v318, 1e-07
        %v321 = vrot.slane %v317, 1
        %v323 = vmul.f32 %v316, %v321
        %v325 = vrot.slane %v319, 1
        %v327 = vmul.f32 %v318, %v325
        %v328 = vadd.f32 %v323, %v327
        %v329 = vsub.f32 %v328, %v315
        %v330 = vadd.f32 %v329, 1e-07
        %v331 = vrcp.pop %v330
        %v332 = vmul.f32 %v330, %v331
        %v333 = vsub.f32 1.0, %v332
        %v334 = vmul.f32 %v331, %v333
        %v335 = vadd.f32 %v331, %v334
        %vm336 = vweird.f32 %v330
        %vm337 = vweird.f32 %v331
        %vm338 = vmor %vm336, %vm337
        %v339 = vsel %vm338, %v331, %v335
        %v340 = vand.u32 2147483647, %v330
        %vm341 = vcmp.eq.f32.partialorder %v340, 8.507059e+37
        %v342 = vand.u32 %v330, 2147483648
        %v343 = vor.u32 1.1754944e-38, %v342
        %v344 = vsel %vm341, %v343, %v339
        %v345 = vmul.f32 %v315, %v344
        %v346 = vmul.f32 %v282, 0.5
        %v348 = vrot.slane %v346, 2
        %v350 = vsub.f32 %v281, %v348
        %v351 = vadd.f32 %v281, %v348
        %v352 = vmul.f32 %v286, 0.5
        %v354 = vrot.slane %v352, 2
        %v356 = vsub.f32 %v285, %v354
        %v357 = vadd.f32 %v285, %v354
        %v358 = vmin.f32 %v351, %v357
        %v359 = vmax.f32 %v350, %v356
        %v360 = vsub.f32 %v358, %v359
        %v361 = vmax.f32 %v360, 0.0
        %v363 = vrot.slane %v361, 1
        %v365 = vmul.f32 %v310, %v363
        %v366 = vadd.f32 %v365, 1e-07
        %v367 = vsub.f32 %v351, %v350
        %v368 = vadd.f32 %v367, 1e-07
        %v369 = vsub.f32 %v357, %v356
        %v370 = vadd.f32 %v369, 1e-07
        %v372 = vrot.slane %v368, 1
        %v374 = vmul.f32 %v316, %v372
        %v376 = vrot.slane %v370, 1
        %v378 = vmul.f32 %v318, %v376
        %v379 = vadd.f32 %v374, %v378
        %v380 = vsub.f32 %v379, %v366
        %v381 = vadd.f32 %v380, 1e-07
        %v382 = vrcp.pop %v381
        %v383 = vmul.f32 %v381, %v382
        %v384 = vsub.f32 1.0, %v383
        %v385 = vmul.f32 %v382, %v384
        %v386 = vadd.f32 %v382, %v385
        %vm387 = vweird.f32 %v381
        %vm388 = vweird.f32 %v382
        %vm389 = vmor %vm387, %vm388
        %v390 = vsel %vm389, %v382, %v386
        %v391 = vand.u32 2147483647, %v381
        %vm392 = vcmp.eq.f32.partialorder %v391, 8.507059e+37
        %v393 = vand.u32 %v381, 2147483648
        %v394 = vor.u32 1.1754944e-38, %v393
        %v395 = vsel %vm392, %v394, %v390
        %v396 = vmul.f32 %v366, %v395
        %v398 = vrot.slane %v396, 5
        %vm400 = vcmp.ge.f32.partialorder %v345, %v398
        %vm401 = vcmp.le.f32.partialorder %v345, %v398
        %vm402 = vcmp.eq.f32.partialorder %v345, %v398
        %v404 = vrot.slane %v281, 5
        %v406 = vsel %vm400, %v281, %v404
        %v407 = vrot.slane %v281, 1
        %v409 = vrot.slane %v281, 6
        %v411 = vsel %vm400, %v407, %v409
        %v412 = vrot.slane %v281, 2
        %v414 = vrot.slane %v281, 7
        %v416 = vsel %vm400, %v412, %v414
        %v417 = vrot.slane %v281, 3
        %v419 = vsel %vm400, %v417, %v282
        %v420 = vrot.slane %v281, 4
        %v423 = vrot.slane %v282, 1
        %v425 = vsel %vm400, %v420, %v423
        %v427 = vrot.slane %v285, 2
        %v429 = vrot.slane %v285, 7
        %v431 = vsel %vm400, %v427, %v429
        %v432 = vrot.slane %v285, 3
        %v434 = vsel %vm400, %v432, %v286
        %v435 = vrot.slane %v285, 4
        %v438 = vrot.slane %v286, 1
        %v440 = vsel %vm400, %v435, %v438
        %v441 = vrot.slane %v285, 5
        %v443 = vsel %vm401, %v285, %v441
        %v444 = vrot.slane %v285, 1
        %v446 = vrot.slane %v285, 6
        %v448 = vsel %vm401, %v444, %v446
        %v449 = vmul.f32 %v443, 7.0
        %v450 = vceil.f32 %v449
        %v451 = vsub.f32 %v449, %v450
        %v452 = vadd.f32 %v451, 1.0
        %v453 = vmul.f32 %v448, 7.0
        %v454 = vceil.f32 %v453
        %v455 = vsub.f32 %v453, %v454
        %v456 = vadd.f32 %v455, 1.0
        %v457 = vsel %vm402, 0.0, %v440
        %v458 = vsel %vm400, %v423, %v420
        %v459 = vsel %vm402, %v438, 0.0
        %v460 = vsub.f32 %v406, %v452
        %v461 = vmul.f32 %v460, %v460
        %v462 = vsub.f32 %v411, %v456
        %v463 = vmul.f32 %v462, %v462
        %v464 = vadd.f32 %v461, %v463
        %vm465 = vcmp.gt.f32.partialorder %v291, 0.0
        %v466 = vadd.f32 %v416, 1e-07
        %v468 = vrot.slane %v466, 4
        %v470 = vsel %vm465, %v468, 1.0
        %v471 = vrsqrt.pop %v470
        %v472 = vmul.f32 %v471, %v470
        %v473 = vmul.f32 %v472, %v471
        %v474 = vmul.f32 0.5, %v473
        %v475 = vsub.f32 1.5, %v474
        %v476 = vmul.f32 %v471, %v475
        %v477 = vmul.f32 %v470, %v476
        %vm478 = vcmp.eq.f32.partialorder %v470, inf
        %v479 = vsel %vm478, %v470, %v477
        %vm480 = vcmp.eq.f32.partialorder %v470, 0.0
        %v481 = vand.u32 %v470, 2147483648
        %v482 = vsel %vm480, %v481, %v479
        %v483 = vadd.f32 %v431, 1e-07
        %v485 = vrot.slane %v483, 4
        %v487 = vsel %vm465, %v485, 1.0
        %v488 = vrsqrt.pop %v487
        %v489 = vmul.f32 %v488, %v487
        %v490 = vmul.f32 %v489, %v488
        %v491 = vmul.f32 0.5, %v490
        %v492 = vsub.f32 1.5, %v491
        %v493 = vmul.f32 %v488, %v492
        %v494 = vmul.f32 %v487, %v493
        %vm495 = vcmp.eq.f32.partialorder %v487, inf
        %v496 = vsel %vm495, %v487, %v494
        %vm497 = vcmp.eq.f32.partialorder %v487, 0.0
        %v498 = vand.u32 %v487, 2147483648
        %v499 = vsel %vm497, %v498, %v496
        %v500 = vsub.f32 %v482, %v499
        %v501 = vmul.f32 %v500, %v500
        %v502 = vadd.f32 %v419, 1e-07
        %v504 = vrot.slane %v502, 4
        %v506 = vsel %vm465, %v504, 1.0
        %v507 = vrsqrt.pop %v506
        %v508 = vmul.f32 %v507, %v506
        %v509 = vmul.f32 %v508, %v507
        %v510 = vmul.f32 0.5, %v509
        %v511 = vsub.f32 1.5, %v510
        %v512 = vmul.f32 %v507, %v511
        %v513 = vmul.f32 %v506, %v512
        %vm514 = vcmp.eq.f32.partialorder %v506, inf
        %v515 = vsel %vm514, %v506, %v513
        %vm516 = vcmp.eq.f32.partialorder %v506, 0.0
        %v517 = vand.u32 %v506, 2147483648
        %v518 = vsel %vm516, %v517, %v515
        %v519 = vadd.f32 %v434, 1e-07
        %v521 = vrot.slane %v519, 4
        %v523 = vsel %vm465, %v521, 1.0
        %v524 = vrsqrt.pop %v523
        %v525 = vmul.f32 %v524, %v523
        %v526 = vmul.f32 %v525, %v524
        %v527 = vmul.f32 0.5, %v526
        %v528 = vsub.f32 1.5, %v527
        %v529 = vmul.f32 %v524, %v528
        %v530 = vmul.f32 %v523, %v529
        %vm531 = vcmp.eq.f32.partialorder %v523, inf
        %v532 = vsel %vm531, %v523, %v530
        %vm533 = vcmp.eq.f32.partialorder %v523, 0.0
        %v534 = vand.u32 %v523, 2147483648
        %v535 = vsel %vm533, %v534, %v532
        %v536 = vsub.f32 %v518, %v535
        %v537 = vmul.f32 %v536, %v536
        %v538 = vadd.f32 %v501, %v537
        %v539 = vsub.f32 %v425, %v457
        %v540 = vmul.f32 %v539, %v539
        %v541 = vsub.f32 %v458, %v459
        %v542 = vmul.f32 %v541, %v541
        %v544 = vrot.slane %v542, 4
        %v546 = vmul.f32 %v291, %v544
        %v547 = vsub.f32 %v281, %v285
        %v548 = vmul.f32 %v547, %v547
        %v549 = vsub.f32 %v282, %v286
        %v550 = vmul.f32 %v549, %v549
        %v552 = vrot.slane %v550, 5
        %v554 = vadd.f32 %v548, %v552
        %v555 = vmul.f32 %v294, %v554
        %v556 = vadd.f32 %v546, %v555
        %v557 = vsub.f32 %v283, %v287
        %v558 = vsub.f32 %v284, %v288
        %v559 = vmul.f32 %v557, %v557
        %v560 = vmul.f32 %v558, %v558
        %vm563 = vcmask 1045504
        %v564 = vrot.slane %v550, 2
        %v565 = vrot.slane %v559, 2
        %v566 = vsel %vm563, %v564, %v565
        %v567 = vrot.slane %v560, 2
        %v568 = vsel %vm563, %v565, %v567
        %v572 = vadd.f32 %v566, %v568
        %vm573 = vcmask 1043456
        %v574 = vsel %vm573, %v567, 0.0
        %v575 = vadd.f32 %v572, %v574
        %v576 = vrot.slane %v575, 4
        %v577 = vadd.f32 %v575, %v576
        %v578 = vrot.slane %v577, 2
        %v579 = vadd.f32 %v577, %v578
        %v580 = vrot.slane %v579, 1
        %v581 = vadd.f32 %v579, %v580
        %v582 = vld [vmem:[#allocation2] sm:$0x1]
        %v584 = vrot.slane %v464, 4
        %v586 = vmul.f32 %v291, %v584
        %v588 = vrot.slane %v586, 4
        %v590 = vadd.f32 %v582, %v588
        %591 = vst [vmem:[#allocation2] sm:$0x1] %v590
        %v592 = vld [vmem:[#allocation2 + $0x1] sm:$0x1]
        %v593 = vmul.f32 %v291, %v538
        %v595 = vrot.slane %v593, 4
        %v597 = vadd.f32 %v592, %v595
        %598 = vst [vmem:[#allocation2 + $0x1] sm:$0x1] %v597
        %v599 = vld [vmem:[#allocation2 + $0x2] sm:$0x1]
        %v601 = vrot.slane %v540, 4
        %v603 = vmul.f32 %v291, %v601
        %v605 = vrot.slane %v603, 4
        %v607 = vadd.f32 %v599, %v605
        %608 = vst [vmem:[#allocation2 + $0x2] sm:$0x1] %v607
        %v609 = vld [vmem:[#allocation2 + $0x3] sm:$0x1]
        %v611 = vrot.slane %v556, 4
        %v613 = vadd.f32 %v609, %v611
        %614 = vst [vmem:[#allocation2 + $0x3] sm:$0x1] %v613
        %v615 = vld [vmem:[#allocation2 + $0x4] sm:$0x1]
        %v616 = vmul.f32 %v291, %v581
        %v618 = vrot.slane %v616, 4
        %v620 = vadd.f32 %v615, %v618
        %621 = vst [vmem:[#allocation2 + $0x4] sm:$0x1] %v620
        // Predicated region
        $region109: #{yolo_loss.1} parent=95 // pred_check
          %p622 = pneg %p276
        $region110: #{yolo_loss.1} parent=95 // pred_check_branch
          %624 = sbr.rel (%p622) target = $region112
        $region111: #{yolo_loss.1} parent=95 // pred_region
          %v625 = vld [vmem:[#allocation2] sm:$0xff]
          %626 = vadd.xlane.f32.xlu0 %v625
          %v627 = vpop.xlane.xlu0 %626
          %628 = vst [vmem:[%s275] sm:$0xff] %v627
        $region112: #{yolo_loss.1} parent=95 // pred_fallthru
          _
        %p629 = scmp.lt.s32.totalorder %s17, 1
        %s630 = scalar_select %p629, %s17, 1
        %s631 = smul.addr %s630, 8
        %s632 = scalar_lea.vmem %s2, %s631
        // Predicated region
        $region113: #{yolo_loss.1} parent=95 // pred_check
          %p633 = pneg %p99
        $region114: #{yolo_loss.1} parent=95 // pred_check_branch
          %635 = sbr.rel (%p633) target = $region116
        $region115: #{yolo_loss.1} parent=95 // pred_region
          _
        $region116: #{yolo_loss.1} parent=95 // pred_fallthru
          _
      $region96: #{yolo_loss.1} parent=5 // pred_fallthru
        _
      %p636 = scmp.le.s32.totalorder 2, %s8
      // Predicated region
      $region117: #{yolo_loss.1} parent=5 // pred_check
        %p637 = pneg %p636
      $region118: #{yolo_loss.1} parent=5 // pred_check_branch
        %639 = sbr.rel (%p637) target = $region120
      $region119: #{yolo_loss.1} parent=5 // pred_region
        %s640 = ssub.s32 %s8, 2
        // Predicated region
        $region121: #{yolo_loss.1} parent=119 // pred_check
          %p641 = pneg %p105
        $region122: #{yolo_loss.1} parent=119 // pred_check_branch
          %643 = sbr.rel (%p641) target = $region124
        $region123: #{yolo_loss.1} parent=119 // pred_region
          %p644 = scmp.lt.s32.totalorder %s19, 1
          %s645 = scalar_select %p644, %s19, 1
          %s646 = smul.addr %s645, 8
          %s647 = scalar_lea.vmem %s2, %s646
        $region124: #{yolo_loss.1} parent=119 // pred_fallthru
          _
      $region120: #{yolo_loss.1} parent=5 // pred_fallthru
        _
    $region6: #{yolo_loss.1} parent=1 // loop_footer
      %s12 = sadd.s32 1, %s8
    $region7: #{yolo_loss.1} parent=1 // loop_footer_branch
      %7 = sbr.rel target = $region3
    $region8: #{yolo_loss.1} parent=1 // loop_exit
      _

</llo_original>
